<compile_context>
chip_gen: v5e
topology: v5e:2x2
jax: 0.10.0
libtpu: 0.0.40
codegen_flags: <defaults>
</compile_context>

<pallas_src>
import functools

import jax
import jax.numpy as jnp
from jax.experimental import pallas as pl
from jax.experimental.pallas import tpu as pltpu

ALPHA = 0.1
USE_PALLAS_BACKWARD = True


# ---------------------------------------------------------------------------
# Per-generation configuration (block byte budget, scoped VMEM, TC count).
# VMEM budget per call ~= (in + out) * 2 buffers * block = 4 * block_bytes.
# ---------------------------------------------------------------------------
@functools.lru_cache(maxsize=1)
def _chip_config():
    kind = ""
    try:
        kind = jax.devices()[0].device_kind.lower()
    except Exception:
        pass
    if "v7" in kind or "tpu7" in kind:
        # v7x: 2 TCs/chip, only 64 MiB physical VMEM, ~3.2 TB/s HBM.
        return dict(block_bytes=6 << 20, vmem_limit_bytes=48 << 20,
                    num_cores=2, upcast_low_precision=False)
    if "v6" in kind:
        # v6e: 1 TC, 128 MiB physical VMEM, bf16 VPU -> native-dtype scale.
        return dict(block_bytes=8 << 20, vmem_limit_bytes=64 << 20,
                    num_cores=1, upcast_low_precision=False)
    if "v5 lite" in kind or "v5e" in kind or "v5lite" in kind or "lite" in kind:
        # v5e: 1 TC, 128 MiB physical VMEM (16 MiB scoped default), no bf16 VPU.
        return dict(block_bytes=4 << 20, vmem_limit_bytes=48 << 20,
                    num_cores=1, upcast_low_precision=True)
    # Unknown / other generations: conservative defaults.
    return dict(block_bytes=4 << 20, vmem_limit_bytes=32 << 20,
                num_cores=1, upcast_low_precision=True)


# ---------------------------------------------------------------------------
# Pallas kernel: out = scale * grad   (scale = -alpha, compile-time constant)
# ---------------------------------------------------------------------------
def _neg_scale_kernel(g_ref, o_ref, *, scale, upcast):
    g = g_ref[...]
    if upcast and g.dtype != jnp.float32:
        # v5e has no bf16 VPU: do the multiply in f32, then cast back.
        o_ref[...] = (g.astype(jnp.float32) * jnp.float32(scale)).astype(o_ref.dtype)
    else:
        # Native-dtype scale (cast the scalar, not the tensor).
        o_ref[...] = g * jnp.asarray(scale, dtype=g.dtype)


# ---------------------------------------------------------------------------
# Layout helpers
# ---------------------------------------------------------------------------
def _lane_dense_layout(padded_total):
    """Widest lane count (multiple of 128) such that rows is a multiple of 8.

    `padded_total` is a multiple of 1024, so lanes=128 always succeeds."""
    for lanes in (2048, 1024, 512, 256, 128):
        if padded_total % (lanes * 8) == 0:
            return padded_total // lanes, lanes
    return padded_total // 128, 128  # unreachable given padded_total % 1024 == 0


def _pick_block_rows(rows, lanes, itemsize, block_bytes, num_cores):
    """Block row count: multiple of 8, sized by the per-chip byte budget only
    (no small-row cap), with >= 2 grid steps per TensorCore when possible."""
    if rows < 16:
        return rows  # tiny tensor: single block == full array
    bytes_per_row = lanes * itemsize
    budget_rows = max(8, ((block_bytes // bytes_per_row) // 8) * 8)
    min_steps = max(2, 2 * num_cores)            # >= 2 blocks per core
    per_step = max(8, ((rows // min_steps) // 8) * 8)
    return min(budget_rows, per_step)


# ---------------------------------------------------------------------------
# Backward wrapper
# ---------------------------------------------------------------------------
def _neg_scale_pallas(g, alpha):
    orig_shape, dtype = g.shape, g.dtype
    total = g.size
    if total == 0:
        return g
    cfg = _chip_config()
    scale = -float(alpha)
    kernel = functools.partial(_neg_scale_kernel, scale=scale,
                               upcast=cfg["upcast_low_precision"])

    # Lane-dense layout: pad the flat gradient up to a multiple of 1024
    # (8 sublanes x 128 lanes) so every shape uses the tiled, pipelined path.
    padded_total = ((total + 1023) // 1024) * 1024
    rows, lanes = _lane_dense_layout(padded_total)
    block_rows = _pick_block_rows(rows, lanes, jnp.dtype(dtype).itemsize,
                                  cfg["block_bytes"], cfg["num_cores"])
    # Pad rows to a block multiple so every grid step is a full, unmasked block.
    final_rows = ((rows + block_rows - 1) // block_rows) * block_rows
    final_total = final_rows * lanes
    grid_steps = final_rows // block_rows

    g_flat = g.reshape(-1)
    if final_total != total:
        g_flat = jnp.pad(g_flat, (0, final_total - total))
    g2 = g_flat.reshape(final_rows, lanes)

    # Engage both v7x TensorCores on the streaming axis; plain "parallel"
    # elsewhere (single-TC chips).
    if cfg["num_cores"] > 1 and grid_steps >= 2 and hasattr(pltpu, "CORE_PARALLEL"):
        semantics = (pltpu.CORE_PARALLEL,)
    else:
        semantics = ("parallel",)

    out2 = pl.pallas_call(
        kernel,
        out_shape=jax.ShapeDtypeStruct((final_rows, lanes), dtype),
        grid=(grid_steps,),
        in_specs=[pl.BlockSpec((block_rows, lanes), lambda i: (i, 0))],
        out_specs=pl.BlockSpec((block_rows, lanes), lambda i: (i, 0)),
        input_output_aliases={0: 0},
        compiler_params=pltpu.CompilerParams(
            dimension_semantics=semantics,
            vmem_limit_bytes=cfg["vmem_limit_bytes"]),
    )(g2)

    out_flat = out2.reshape(-1)
    if final_total != total:
        out_flat = out_flat[:total]
    return out_flat.reshape(orig_shape)


# ---------------------------------------------------------------------------
# Gradient-reversal op with custom VJP (matches GradientReversalFunction)
# ---------------------------------------------------------------------------
@functools.partial(jax.custom_vjp, nondiff_argnums=(1,))
def gradient_reversal(x, alpha):
    # Forward is a view in PyTorch (x.view_as(x)) -> identity, no kernel needed.
    return x


def _grl_fwd(x, alpha):
    return x, None


def _grl_bwd(alpha, _residuals, g):
    if not USE_PALLAS_BACKWARD:
        # Let XLA fuse the scale into the surrounding cotangent computation.
        return ((-alpha) * g,)
    return (_neg_scale_pallas(g, alpha),)


gradient_reversal.defvjp(_grl_fwd, _grl_bwd)


class GradientReversal:
    """JAX/Pallas equivalent of the PyTorch GradientReversal module."""

    def __init__(self, alpha=1.0):
        self.alpha = alpha

    def __call__(self, x):
        return gradient_reversal(x, self.alpha)


# ---------------------------------------------------------------------------
# Demo / smoke test
# ---------------------------------------------------------------------------
if __name__ == "__main__":
    grl = GradientReversal(alpha=ALPHA)

    # ---- NCHW input matching the PyTorch usage (batch=2, ch=4, 16x16) ----
    x = jax.random.normal(jax.random.PRNGKey(0), (2, 4, 16, 16), dtype=jnp.float32)

    # Forward: identity (view semantics).
    y = grl(x)
    jax.block_until_ready(y)
    assert y.shape == x.shape and y.dtype == x.dtype
    assert jnp.allclose(y, x), "forward must be identity"

    # Backward: grad of sum(grl(x)) == -alpha * ones (runs the Pallas kernel).
    grad_x = jax.grad(lambda v: jnp.sum(grl(v)))(x)
    jax.block_until_ready(grad_x)
    assert jnp.allclose(grad_x, -ALPHA * jnp.ones_like(x), atol=1e-6), \
        "backward must be -alpha * grad_output"

    # ---- Multi-block path (grid > 1: exercises the pipelined stream) ----
    x2 = jax.random.normal(jax.random.PRNGKey(1), (64, 1024), dtype=jnp.float32)
    grad_x2 = jax.grad(lambda v: jnp.sum(grl(v) * 2.0))(x2)
    jax.block_until_ready(grad_x2)
    assert jnp.allclose(grad_x2, -2.0 * ALPHA * jnp.ones_like(x2), atol=1e-6)

    # ---- Non-128-divisible element count (exercises the pad path) ----
    x3 = jax.random.normal(jax.random.PRNGKey(2), (3, 5, 7), dtype=jnp.float32)
    ct = jax.random.normal(jax.random.PRNGKey(3), x3.shape, dtype=jnp.float32)
    _, vjp_fn = jax.vjp(lambda v: grl(v), x3)
    (grad_x3,) = vjp_fn(ct)
    jax.block_until_ready(grad_x3)
    assert jnp.allclose(grad_x3, -ALPHA * ct, atol=1e-6)

    print("KERNEL_OK")
</pallas_src>

<mosaic_0001>
module attributes {stable_mosaic.version = 11 : i64} {
  func.func @_neg_scale_kernel(%arg0: i32, %arg1: memref<8x256xf32, #tpu.memory_space<vmem>>, %arg2: memref<8x256xf32, #tpu.memory_space<vmem>>) attributes {dimension_semantics = [#tpu.dimension_semantics<parallel>], iteration_bounds = array<i64: 1>, scalar_prefetch = 0 : i64, scratch_operands = 0 : i64, tpu.core_type = #tpu.core_type<tc>, window_params = [{transform_indices = @transform_0, window_bounds = array<i64: 8, 256>}, {transform_indices = @transform_1, window_bounds = array<i64: 8, 256>}]} {
    %c0 = arith.constant 0 : index
    %c0_0 = arith.constant 0 : index
    %0 = vector.load %arg1[%c0, %c0_0] : memref<8x256xf32, #tpu.memory_space<vmem>>, vector<8x256xf32>
    %cst = arith.constant -1.000000e-01 : f32
    %1 = vector.broadcast %cst : f32 to vector<8x256xf32>
    %2 = arith.mulf %0, %1 : vector<8x256xf32>
    %c0_1 = arith.constant 0 : index
    %c0_2 = arith.constant 0 : index
    %3 = vector.load %arg2[%c0_1, %c0_2] : memref<8x256xf32, #tpu.memory_space<vmem>>, vector<8x256xf32>
    tpu.vector_store %arg2[%c0_1, %c0_2], %2 {strides = array<i32>} : memref<8x256xf32, #tpu.memory_space<vmem>>, vector<8x256xf32>,
    return
  }
  func.func @transform_0(%arg0: i32) -> (i32, i32) {
    %c0_i32 = arith.constant 0 : i32
    %c0_i32_0 = arith.constant 0 : i32
    return %arg0, %c0_i32 : i32, i32
  }
  func.func @transform_1(%arg0: i32) -> (i32, i32) {
    %c0_i32 = arith.constant 0 : i32
    %c0_i32_0 = arith.constant 0 : i32
    return %arg0, %c0_i32 : i32, i32
  }
}

</mosaic_0001>

<llo_original>
// kernel: tpu_custom_call.1
$region0: #{tpu_custom_call.1}
  #allocation0 [shape = 'u32[]', space=smem, size = 0x4, offset = 0x4, fixed_abs, tag = 'smem constant byte address 0x4 - core index']
  #allocation1 [shape = 'u32[72,128]{1,0:T(1,128)}', space=vmem, size = 0x9000, scoped, tag = 'internal scratch']
  %s0 = inlined_call_operand.hbm [shape: f32[8,256], index: 0, kind: input, shape index: {}, may-alias: {0,1}]
  %s1 = inlined_call_operand.hbm [shape: f32[8,256], index: 1, kind: output, shape index: {}, may-alias: {0,1}]
  %s2 = sld [smem:[#allocation0]]
  $region18: #{tpu_custom_call.1} parent=0
    _
  %s4 = ssub.s32 1, %s2
  %s5 = scalar_select 0, %s4, %s2
  $region1: #{tpu_custom_call.1} parent=0
    #allocation2 [shape = 'u8[8192]{0}', space=vmem, size = 0x2000, scoped, tag = 'input window, operand 0, single buffered']
    #allocation3 [shape = 's32[1]{0}', space=sflag, size = 0x4, scoped, tag = 'scoped memory for tpu_custom_call.1']
    #allocation4 [shape = 's32[1]{0}', space=sflag, size = 0x4, scoped, tag = 'scoped memory for tpu_custom_call.1']
    #allocation5 [shape = 'u8[8192]{0}', space=vmem, size = 0x2000, scoped, tag = 'output window, operand 0, single buffered']
    %6 = vsyncpa [#allocation3], 0
    %7 = vsyncpa [#allocation4], 0
    // Predicated region
    $region2: #{tpu_custom_call.1} parent=1 // pred_check
      _
    $region3: #{tpu_custom_call.1} parent=1 // pred_check_branch
      %9 = sbr.rel (0) target = $region5
    $region4: #{tpu_custom_call.1} parent=1 // pred_region
      %11 = vsyncadd [#allocation3], 0
      %s13 = sshll.u32 %s0, 4
      %s14 = int_to_ptr.hbm [resolvable:$true] %s13
      %s15 = sshll.u32 [#allocation2], 4
      %s16 = int_to_ptr.vmem [resolvable:$true] %s15
      %18 = dma.hbm_to_vmem [thread:$0]  %s14, 256, %s16, [#allocation3]
    $region5: #{tpu_custom_call.1} parent=1 // pred_fallthru
      _
    // Predicated region
    $region6: #{tpu_custom_call.1} parent=1 // pred_check
      _
    $region7: #{tpu_custom_call.1} parent=1 // pred_check_branch
      %20 = sbr.rel (0) target = $region9
    $region8: #{tpu_custom_call.1} parent=1 // pred_region
      %22 = dma.done [#allocation3], 256
    $region9: #{tpu_custom_call.1} parent=1 // pred_fallthru
      _
    %v23 = vld [vmem:[#allocation2] sm:$0xff]
    %v24 = vld [vmem:[#allocation2 + $0x8] sm:$0xff]
    %v25 = vmul.f32 %v23, -0.1
    %v26 = vmul.f32 %v24, -0.1
    %27 = vst [vmem:[#allocation5] sm:$0xff] %v25
    %28 = vst [vmem:[#allocation5 + $0x8] sm:$0xff] %v26
    // Predicated region
    $region10: #{tpu_custom_call.1} parent=1 // pred_check
      _
    $region11: #{tpu_custom_call.1} parent=1 // pred_check_branch
      %30 = sbr.rel (0) target = $region13
    $region12: #{tpu_custom_call.1} parent=1 // pred_region
      %32 = vsyncadd [#allocation4], 0
      %s34 = sshll.u32 [#allocation5], 4
      %s35 = int_to_ptr.vmem [resolvable:$true] %s34
      %s36 = sshll.u32 %s1, 4
      %s37 = int_to_ptr.hbm [resolvable:$true] %s36
      %39 = dma.vmem_to_hbm [thread:$0]  %s35, 256, %s37, [#allocation4]
    $region13: #{tpu_custom_call.1} parent=1 // pred_fallthru
      _
    // Predicated region
    $region14: #{tpu_custom_call.1} parent=1 // pred_check
      _
    $region15: #{tpu_custom_call.1} parent=1 // pred_check_branch
      %41 = sbr.rel (0) target = $region17
    $region16: #{tpu_custom_call.1} parent=1 // pred_region
      %43 = dma.done [#allocation4], 256
    $region17: #{tpu_custom_call.1} parent=1 // pred_fallthru
      _
    %44 = vsyncpa [#allocation3], 1
    %45 = vsyncpa [#allocation4], 1

</llo_original>
